<compile_context>
chip_gen: v7x
topology: tpu7x:2x2x1
jax: 0.10.0
libtpu: 0.0.40
codegen_flags: <defaults>
</compile_context>

<pallas_src>
import functools

import numpy as np
import jax
import jax.numpy as jnp
from jax.experimental import pallas as pl
from jax.experimental.pallas import tpu as pltpu


_BP_DTYPE = jnp.int8   # block_pattern holds only 0/1; int8 cuts its HBM traffic 4x.


def _sliding_min(a, k, axis):
    """Sliding-window minimum of length k along `axis` (log-depth doubling).

    Output length along `axis` is a.shape[axis] - k + 1.
    """
    def win(arr, off, length):
        idx = [slice(None)] * arr.ndim
        idx[axis] = slice(off, off + length)
        return arr[tuple(idx)]

    out = a
    w = 1
    while 2 * w <= k:
        n = out.shape[axis] - w
        out = jnp.minimum(win(out, 0, n), win(out, w, n))
        w *= 2
    r = k - w
    if r > 0:
        n = out.shape[axis] - r
        out = jnp.minimum(win(out, 0, n), win(out, r, n))
    return out


def _pattern_kernel(u_ref, x_ref, bp_ref, sbp_ref, sx_ref, sx2_ref, pad_ref, *,
                    block_size, seed_drop_rate):
    """One batch of B (n,c) planes per grid step: block_pattern + partial sums."""
    B, H, W = x_ref.shape
    k = block_size
    p = k // 2

    u = u_ref[...]                      # (B, H, W) uniform noise
    x = x_ref[...]                      # (B, H, W)

    # valid-block-center mask on the H x W domain (shared by all planes).
    row = jax.lax.broadcasted_iota(jnp.int32, (H, W), 0)
    col = jax.lax.broadcasted_iota(jnp.int32, (H, W), 1)
    lo = k // 2
    valid = ((row >= lo) & (row < H - (k - 1) // 2) &
             (col >= lo) & (col < W - (k - 1) // 2)).astype(jnp.float32)

    # seed mask (exact torch formula): 0.0 where a distortion block is seeded.
    seed = ((1.0 - valid)[None, :, :] + (1.0 - seed_drop_rate) + u >= 1.0
            ).astype(jnp.float32)

    if k == H and k == W:
        # block covers the whole plane: per-plane global min, broadcast.
        bp = jnp.broadcast_to(jnp.min(seed, axis=(1, 2), keepdims=True),
                              seed.shape)
    else:
        # min-pool == -max_pool2d(-seed, k, stride=1, padding=k//2) plus the
        # even-block-size trim.  torch pads with -inf (padding never wins the
        # min); place the seed inside a 1.0-filled VMEM container (1.0 is the
        # max possible value) and run a separable log-depth sliding min.
        R, C = H + k - 1, W + k - 1
        pad_ref[...] = jnp.ones((B, R, C), jnp.float32)
        pad_ref[:, p:p + H, p:p + W] = seed
        rows_min = _sliding_min(pad_ref[...], k, axis=1)   # (B, H, C)
        bp = _sliding_min(rows_min, k, axis=2)             # (B, H, W)

    bp_ref[...] = bp.astype(bp_ref.dtype)

    # Per-grid-step partial sums (lane-dense 128-wide rows; column 0 is used).
    sbp_ref[...] = jnp.broadcast_to(
        jnp.sum(bp.sum(axis=0), keepdims=True), (1, 128))
    sx_ref[...] = jnp.broadcast_to(
        jnp.sum(x.sum(axis=0), keepdims=True), (1, 128))
    sx2_ref[...] = jnp.broadcast_to(
        jnp.sum((x * x).sum(axis=0), keepdims=True), (1, 128))


def _apply_kernel(scal_ref, x_ref, bp_ref, g_ref, o_ref):
    """out = x*bp/percent_ones + (dist_coef/percent_ones)*g*(1-bp)."""
    inv_p = scal_ref[0]                 # 1 / percent_ones
    coef = scal_ref[1]                  # alpha*0.01*sqrt(var) / percent_ones
    bp = bp_ref[...].astype(jnp.float32)
    o_ref[...] = x_ref[...] * (bp * inv_p) + (coef * g_ref[...]) * (1.0 - bp)


def _vmem_plane_bytes(h, w, itemsize, sublane=8):
    """Rough VMEM footprint of one (h, w) slab after (sublane, 128) tiling."""
    return (-(-h // sublane) * sublane) * (-(-w // 128) * 128) * itemsize


def _pick_batch(n, bytes_per, budget, want_mult8=False):
    """Largest divisor of n with batch * bytes_per <= budget (always >= 1)."""
    cap = int(max(1, min(n, budget // max(int(bytes_per), 1))))
    fallback = None
    for d in range(cap, 0, -1):
        if n % d:
            continue
        if fallback is None:
            fallback = d
        if (not want_mult8) or d == n or d % 8 == 0:
            return d
    return fallback if fallback is not None else 1


@functools.partial(jax.jit,
                   static_argnames=("dist_prob", "block_size", "alpha",
                                    "training"))
def disout_pallas(x, u, g, *, dist_prob, block_size=10, alpha=5,
                  training=True):
    """Disout forward.  x, u, g: (N, C, H, W); u ~ U[0,1), g ~ N(0,1)."""
    if not training:
        return x

    N, C, H, W = x.shape
    NC = N * C
    HW = H * W
    k = block_size

    # Same formula as torch; guarded against a non-positive denominator
    # (torch would divide by <= 0 when block_size >= H or W).
    denom = (H - k + 1) * (W - k + 1)
    seed_drop_rate = float(dist_prob * HW / k ** 2 / max(denom, 1))

    x_f = x.reshape(NC, H, W).astype(jnp.float32)
    u_f = u.reshape(NC, H, W).astype(jnp.float32)
    g_f = g.reshape(NC, H, W).astype(jnp.float32)

    # ---- kernel A: block_pattern + per-step partial sums ------------------
    R, Cp = H + k - 1, W + k - 1
    per_plane = (4 * _vmem_plane_bytes(H, W, 4)        # u, x, double-buffered
                 + 2 * _vmem_plane_bytes(H, W, 1, 32)  # int8 bp, double-buffered
                 + _vmem_plane_bytes(R, Cp, 4))        # padded scratch
    ba = _pick_batch(NC, per_plane, 4 << 20)
    ga = NC // ba

    kernel_a = functools.partial(_pattern_kernel, block_size=k,
                                 seed_drop_rate=seed_drop_rate)

    bp, pbp, px, px2 = pl.pallas_call(
        kernel_a,
        out_shape=(
            jax.ShapeDtypeStruct((NC, H, W), _BP_DTYPE),
            jax.ShapeDtypeStruct((ga, 128), jnp.float32),
            jax.ShapeDtypeStruct((ga, 128), jnp.float32),
            jax.ShapeDtypeStruct((ga, 128), jnp.float32),
        ),
        grid_spec=pltpu.PrefetchScalarGridSpec(
            num_scalar_prefetch=0,
            grid=(ga,),
            in_specs=[
                pl.BlockSpec((ba, H, W), lambda i: (i, 0, 0)),
                pl.BlockSpec((ba, H, W), lambda i: (i, 0, 0)),
            ],
            out_specs=[
                pl.BlockSpec((ba, H, W), lambda i: (i, 0, 0)),
                pl.BlockSpec((1, 128), lambda i: (i, 0)),
                pl.BlockSpec((1, 128), lambda i: (i, 0)),
                pl.BlockSpec((1, 128), lambda i: (i, 0)),
            ],
            scratch_shapes=[pltpu.VMEM((ba, R, Cp), jnp.float32)],
        ),
        compiler_params=pltpu.CompilerParams(
            dimension_semantics=("parallel",)),
    )(u_f, x_f)

    # ---- glue: global statistics ------------------------------------------
    n_elem = float(NC * HW)
    s_bp = jnp.sum(pbp[:, 0])
    s_x = jnp.sum(px[:, 0])
    s_x2 = jnp.sum(px2[:, 0])
    percent_ones = s_bp / n_elem
    mean = s_x / n_elem
    var = jnp.maximum(s_x2 - n_elem * mean * mean, 0.0) / max(n_elem - 1.0, 1.0)
    dist_coef = alpha * 0.01 * jnp.sqrt(var)
    inv_p = 1.0 / percent_ones
    scalars = jnp.stack([inv_p, dist_coef * inv_p]).astype(jnp.float32)

    # ---- kernel B: lane-dense elementwise apply ----------------------------
    lane_row = -(-HW // 128) * 128
    row_bytes = 2 * (3 * lane_row * 4 + lane_row * 1)   # x, g, out f32 + int8 bp
    bb = _pick_batch(NC, row_bytes, 4 << 20, want_mult8=True)

    out2d = pl.pallas_call(
        _apply_kernel,
        out_shape=jax.ShapeDtypeStruct((NC, HW), jnp.float32),
        grid_spec=pltpu.PrefetchScalarGridSpec(
            num_scalar_prefetch=0,
            grid=(NC // bb,),
            in_specs=[
                pl.BlockSpec(memory_space=pltpu.MemorySpace.SMEM),
                pl.BlockSpec((bb, HW), lambda i: (i, 0)),
                pl.BlockSpec((bb, HW), lambda i: (i, 0)),
                pl.BlockSpec((bb, HW), lambda i: (i, 0)),
            ],
            out_specs=pl.BlockSpec((bb, HW), lambda i: (i, 0)),
        ),
        compiler_params=pltpu.CompilerParams(
            dimension_semantics=("parallel",)),
    )(scalars, x_f.reshape(NC, HW), bp.reshape(NC, HW), g_f.reshape(NC, HW))

    return out2d.reshape(N, C, H, W).astype(x.dtype)


def disout_reference(x, u, g, dist_prob, block_size=10, alpha=5):
    """Pure-JAX replica of the PyTorch forward (given identical noise u, g)."""
    N, C, H, W = x.shape
    sdr = dist_prob * (H * W) / block_size ** 2 / \
        ((H - block_size + 1) * (W - block_size + 1))
    valid = jnp.zeros((H, W), jnp.float32)
    valid = valid.at[block_size // 2:H - (block_size - 1) // 2,
                     block_size // 2:W - (block_size - 1) // 2].set(1.0)
    valid = valid[None, None]
    bp = ((1.0 - valid) + float(1.0 - sdr) + u >= 1.0).astype(jnp.float32)
    p = block_size // 2
    bp = -jax.lax.reduce_window(
        -bp, -jnp.inf, jax.lax.max,
        (1, 1, block_size, block_size), (1, 1, 1, 1),
        [(0, 0), (0, 0), (p, p), (p, p)])
    if block_size % 2 == 0:
        bp = bp[:, :, :-1, :-1]
    percent_ones = bp.sum() / bp.size
    var = jnp.var(x, ddof=1)
    dist = alpha * 0.01 * jnp.sqrt(var) * g
    return (x * bp + dist * (1.0 - bp)) / percent_ones


if __name__ == "__main__":
    N, C, H, W = 2, 4, 16, 16
    dist_prob, block_size, alpha = 0.5, 10, 5

    key = jax.random.PRNGKey(0)
    kx, ku, kg = jax.random.split(key, 3)
    x = jax.random.normal(kx, (N, C, H, W), dtype=jnp.float32)
    u = jax.random.uniform(ku, (N, C, H, W), dtype=jnp.float32)
    g = jax.random.normal(kg, (N, C, H, W), dtype=jnp.float32)

    out = disout_pallas(x, u, g, dist_prob=dist_prob, block_size=block_size,
                        alpha=alpha, training=True)
    out = jax.block_until_ready(out)

    ref = disout_reference(x, u, g, dist_prob, block_size, alpha)
    np.testing.assert_allclose(np.asarray(out), np.asarray(ref),
                               rtol=1e-4, atol=1e-5)
    assert out.shape == (N, C, H, W) and out.dtype == jnp.float32
    print("KERNEL_OK")
</pallas_src>

<mosaic_0001>
module attributes {stable_mosaic.version = 11 : i64} {
  func.func @_pattern_kernel(%arg0: i32, %arg1: memref<8x16x16xf32, #tpu.memory_space<vmem>>, %arg2: memref<8x16x16xf32, #tpu.memory_space<vmem>>, %arg3: memref<8x16x16xi8, #tpu.memory_space<vmem>>, %arg4: memref<1x128xf32, #tpu.memory_space<vmem>>, %arg5: memref<1x128xf32, #tpu.memory_space<vmem>>, %arg6: memref<1x128xf32, #tpu.memory_space<vmem>>, %arg7: memref<8x25x25xf32, #tpu.memory_space<vmem>>) attributes {dimension_semantics = [#tpu.dimension_semantics<parallel>], iteration_bounds = array<i64: 1>, scalar_prefetch = 0 : i64, scratch_operands = 1 : i64, tpu.core_type = #tpu.core_type<tc>, window_params = [{transform_indices = @transform_0, window_bounds = array<i64: 8, 16, 16>}, {transform_indices = @transform_1, window_bounds = array<i64: 8, 16, 16>}, {transform_indices = @transform_2, window_bounds = array<i64: 8, 16, 16>}, {transform_indices = @transform_3, window_bounds = array<i64: 1, 128>}, {transform_indices = @transform_4, window_bounds = array<i64: 1, 128>}, {transform_indices = @transform_5, window_bounds = array<i64: 1, 128>}]} {
    %c0 = arith.constant 0 : index
    %c0_0 = arith.constant 0 : index
    %c0_1 = arith.constant 0 : index
    %0 = vector.load %arg1[%c0, %c0_0, %c0_1] : memref<8x16x16xf32, #tpu.memory_space<vmem>>, vector<8x16x16xf32>
    %c0_2 = arith.constant 0 : index
    %c0_3 = arith.constant 0 : index
    %c0_4 = arith.constant 0 : index
    %1 = vector.load %arg2[%c0_2, %c0_3, %c0_4] : memref<8x16x16xf32, #tpu.memory_space<vmem>>, vector<8x16x16xf32>
    %2 = tpu.iota {dimensions = array<i32: 0>} : vector<16x16xi32>
    %3 = tpu.iota {dimensions = array<i32: 1>} : vector<16x16xi32>
    %c5_i32 = arith.constant 5 : i32
    %4 = vector.broadcast %c5_i32 : i32 to vector<16x16xi32>
    %5 = arith.cmpi sge, %2, %4 : vector<16x16xi32>
    %c12_i32 = arith.constant 12 : i32
    %6 = vector.broadcast %c12_i32 : i32 to vector<16x16xi32>
    %7 = arith.cmpi slt, %2, %6 : vector<16x16xi32>
    %8 = arith.andi %5, %7 : vector<16x16xi1>
    %c5_i32_5 = arith.constant 5 : i32
    %9 = vector.broadcast %c5_i32_5 : i32 to vector<16x16xi32>
    %10 = arith.cmpi sge, %3, %9 : vector<16x16xi32>
    %11 = arith.andi %8, %10 : vector<16x16xi1>
    %c12_i32_6 = arith.constant 12 : i32
    %12 = vector.broadcast %c12_i32_6 : i32 to vector<16x16xi32>
    %13 = arith.cmpi slt, %3, %12 : vector<16x16xi32>
    %14 = arith.andi %11, %13 : vector<16x16xi1>
    %15 = arith.extui %14 : vector<16x16xi1> to vector<16x16xi32>
    %16 = arith.sitofp %15 : vector<16x16xi32> to vector<16x16xf32>
    %cst = arith.constant 1.000000e+00 : f32
    %17 = vector.broadcast %cst : f32 to vector<16x16xf32>
    %18 = arith.subf %17, %16 : vector<16x16xf32>
    %19 = vector.shape_cast %18 : vector<16x16xf32> to vector<1x16x16xf32>
    %cst_7 = arith.constant 0.973877549 : f32
    %20 = vector.broadcast %cst_7 : f32 to vector<1x16x16xf32>
    %21 = arith.addf %19, %20 : vector<1x16x16xf32>
    %22 = vector.broadcast %21 : vector<1x16x16xf32> to vector<8x16x16xf32>
    %23 = arith.addf %22, %0 : vector<8x16x16xf32>
    %cst_8 = arith.constant 1.000000e+00 : f32
    %24 = vector.broadcast %cst_8 : f32 to vector<8x16x16xf32>
    %25 = arith.cmpf oge, %23, %24 : vector<8x16x16xf32>
    %26 = arith.extui %25 : vector<8x16x16xi1> to vector<8x16x16xi32>
    %27 = arith.sitofp %26 : vector<8x16x16xi32> to vector<8x16x16xf32>
    %cst_9 = arith.constant 1.000000e+00 : f32
    %28 = vector.broadcast %cst_9 : f32 to vector<8x25x25xf32>
    %c0_10 = arith.constant 0 : index
    %c0_11 = arith.constant 0 : index
    %c0_12 = arith.constant 0 : index
    %29 = vector.load %arg7[%c0_10, %c0_11, %c0_12] : memref<8x25x25xf32, #tpu.memory_space<vmem>>, vector<8x25x25xf32>
    tpu.vector_store %arg7[%c0_10, %c0_11, %c0_12], %28 {strides = array<i32>} : memref<8x25x25xf32, #tpu.memory_space<vmem>>, vector<8x25x25xf32>,
    %c0_13 = arith.constant 0 : index
    %c5 = arith.constant 5 : index
    %c5_14 = arith.constant 5 : index
    %30 = vector.load %arg7[%c0_13, %c5, %c5_14] : memref<8x25x25xf32, #tpu.memory_space<vmem>>, vector<8x16x16xf32>
    tpu.vector_store %arg7[%c0_13, %c5, %c5_14], %27 {strides = array<i32>} : memref<8x25x25xf32, #tpu.memory_space<vmem>>, vector<8x16x16xf32>,
    %c0_15 = arith.constant 0 : index
    %c0_16 = arith.constant 0 : index
    %c0_17 = arith.constant 0 : index
    %31 = vector.load %arg7[%c0_15, %c0_16, %c0_17] : memref<8x25x25xf32, #tpu.memory_space<vmem>>, vector<8x25x25xf32>
    %32 = vector.extract_strided_slice %31 {offsets = [0, 0, 0], sizes = [8, 24, 25], strides = [1, 1, 1]} : vector<8x25x25xf32> to vector<8x24x25xf32>
    %33 = vector.extract_strided_slice %31 {offsets = [0, 1, 0], sizes = [8, 24, 25], strides = [1, 1, 1]} : vector<8x25x25xf32> to vector<8x24x25xf32>
    %34 = arith.minimumf %32, %33 : vector<8x24x25xf32>
    %35 = vector.extract_strided_slice %34 {offsets = [0, 0, 0], sizes = [8, 22, 25], strides = [1, 1, 1]} : vector<8x24x25xf32> to vector<8x22x25xf32>
    %36 = vector.extract_strided_slice %34 {offsets = [0, 2, 0], sizes = [8, 22, 25], strides = [1, 1, 1]} : vector<8x24x25xf32> to vector<8x22x25xf32>
    %37 = arith.minimumf %35, %36 : vector<8x22x25xf32>
    %38 = vector.extract_strided_slice %37 {offsets = [0, 0, 0], sizes = [8, 18, 25], strides = [1, 1, 1]} : vector<8x22x25xf32> to vector<8x18x25xf32>
    %39 = vector.extract_strided_slice %37 {offsets = [0, 4, 0], sizes = [8, 18, 25], strides = [1, 1, 1]} : vector<8x22x25xf32> to vector<8x18x25xf32>
    %40 = arith.minimumf %38, %39 : vector<8x18x25xf32>
    %41 = vector.extract_strided_slice %40 {offsets = [0, 0, 0], sizes = [8, 16, 25], strides = [1, 1, 1]} : vector<8x18x25xf32> to vector<8x16x25xf32>
    %42 = vector.extract_strided_slice %40 {offsets = [0, 2, 0], sizes = [8, 16, 25], strides = [1, 1, 1]} : vector<8x18x25xf32> to vector<8x16x25xf32>
    %43 = arith.minimumf %41, %42 : vector<8x16x25xf32>
    %44 = vector.extract_strided_slice %43 {offsets = [0, 0, 0], sizes = [8, 16, 24], strides = [1, 1, 1]} : vector<8x16x25xf32> to vector<8x16x24xf32>
    %45 = vector.extract_strided_slice %43 {offsets = [0, 0, 1], sizes = [8, 16, 24], strides = [1, 1, 1]} : vector<8x16x25xf32> to vector<8x16x24xf32>
    %46 = arith.minimumf %44, %45 : vector<8x16x24xf32>
    %47 = vector.extract_strided_slice %46 {offsets = [0, 0, 0], sizes = [8, 16, 22], strides = [1, 1, 1]} : vector<8x16x24xf32> to vector<8x16x22xf32>
    %48 = vector.extract_strided_slice %46 {offsets = [0, 0, 2], sizes = [8, 16, 22], strides = [1, 1, 1]} : vector<8x16x24xf32> to vector<8x16x22xf32>
    %49 = arith.minimumf %47, %48 : vector<8x16x22xf32>
    %50 = vector.extract_strided_slice %49 {offsets = [0, 0, 0], sizes = [8, 16, 18], strides = [1, 1, 1]} : vector<8x16x22xf32> to vector<8x16x18xf32>
    %51 = vector.extract_strided_slice %49 {offsets = [0, 0, 4], sizes = [8, 16, 18], strides = [1, 1, 1]} : vector<8x16x22xf32> to vector<8x16x18xf32>
    %52 = arith.minimumf %50, %51 : vector<8x16x18xf32>
    %53 = vector.extract_strided_slice %52 {offsets = [0, 0, 0], sizes = [8, 16, 16], strides = [1, 1, 1]} : vector<8x16x18xf32> to vector<8x16x16xf32>
    %54 = vector.extract_strided_slice %52 {offsets = [0, 0, 2], sizes = [8, 16, 16], strides = [1, 1, 1]} : vector<8x16x18xf32> to vector<8x16x16xf32>
    %55 = arith.minimumf %53, %54 : vector<8x16x16xf32>
    %56 = arith.fptosi %55 : vector<8x16x16xf32> to vector<8x16x16xi8>
    %c0_18 = arith.constant 0 : index
    %c0_19 = arith.constant 0 : index
    %c0_20 = arith.constant 0 : index
    %57 = vector.load %arg3[%c0_18, %c0_19, %c0_20] : memref<8x16x16xi8, #tpu.memory_space<vmem>>, vector<8x16x16xi8>
    tpu.vector_store %arg3[%c0_18, %c0_19, %c0_20], %56 {strides = array<i32>} : memref<8x16x16xi8, #tpu.memory_space<vmem>>, vector<8x16x16xi8>,
    %cst_21 = arith.constant dense<0.000000e+00> : vector<16x16xf32>
    %58 = vector.multi_reduction <add>, %55, %cst_21 [0] : vector<8x16x16xf32> to vector<16x16xf32>
    %59 = vector.shape_cast %58 : vector<16x16xf32> to vector<1x16x16xf32>
    %cst_22 = arith.constant dense<0.000000e+00> : vector<1xf32>
    %60 = vector.multi_reduction <add>, %59, %cst_22 [1, 2] : vector<1x16x16xf32> to vector<1xf32>
    %61 = vector.shape_cast %60 : vector<1xf32> to vector<1x1x1xf32>
    %62 = vector.extract %61[0, 0, 0] : f32 from vector<1x1x1xf32>
    %63 = vector.broadcast %62 : f32 to vector<1x1xf32>
    %64 = vector.shape_cast %63 : vector<1x1xf32> to vector<1x1xf32>
    %65 = vector.broadcast %64 : vector<1x1xf32> to vector<1x128xf32>
    %c0_23 = arith.constant 0 : index
    %c0_24 = arith.constant 0 : index
    %66 = vector.load %arg4[%c0_23, %c0_24] : memref<1x128xf32, #tpu.memory_space<vmem>>, vector<1x128xf32>
    tpu.vector_store %arg4[%c0_23, %c0_24], %65 {strides = array<i32>} : memref<1x128xf32, #tpu.memory_space<vmem>>, vector<1x128xf32>,
    %cst_25 = arith.constant dense<0.000000e+00> : vector<16x16xf32>
    %67 = vector.multi_reduction <add>, %1, %cst_25 [0] : vector<8x16x16xf32> to vector<16x16xf32>
    %68 = vector.shape_cast %67 : vector<16x16xf32> to vector<1x16x16xf32>
    %cst_26 = arith.constant dense<0.000000e+00> : vector<1xf32>
    %69 = vector.multi_reduction <add>, %68, %cst_26 [1, 2] : vector<1x16x16xf32> to vector<1xf32>
    %70 = vector.shape_cast %69 : vector<1xf32> to vector<1x1x1xf32>
    %71 = vector.extract %70[0, 0, 0] : f32 from vector<1x1x1xf32>
    %72 = vector.broadcast %71 : f32 to vector<1x1xf32>
    %73 = vector.shape_cast %72 : vector<1x1xf32> to vector<1x1xf32>
    %74 = vector.broadcast %73 : vector<1x1xf32> to vector<1x128xf32>
    %c0_27 = arith.constant 0 : index
    %c0_28 = arith.constant 0 : index
    %75 = vector.load %arg5[%c0_27, %c0_28] : memref<1x128xf32, #tpu.memory_space<vmem>>, vector<1x128xf32>
    tpu.vector_store %arg5[%c0_27, %c0_28], %74 {strides = array<i32>} : memref<1x128xf32, #tpu.memory_space<vmem>>, vector<1x128xf32>,
    %76 = arith.mulf %1, %1 : vector<8x16x16xf32>
    %cst_29 = arith.constant dense<0.000000e+00> : vector<16x16xf32>
    %77 = vector.multi_reduction <add>, %76, %cst_29 [0] : vector<8x16x16xf32> to vector<16x16xf32>
    %78 = vector.shape_cast %77 : vector<16x16xf32> to vector<1x16x16xf32>
    %cst_30 = arith.constant dense<0.000000e+00> : vector<1xf32>
    %79 = vector.multi_reduction <add>, %78, %cst_30 [1, 2] : vector<1x16x16xf32> to vector<1xf32>
    %80 = vector.shape_cast %79 : vector<1xf32> to vector<1x1x1xf32>
    %81 = vector.extract %80[0, 0, 0] : f32 from vector<1x1x1xf32>
    %82 = vector.broadcast %81 : f32 to vector<1x1xf32>
    %83 = vector.shape_cast %82 : vector<1x1xf32> to vector<1x1xf32>
    %84 = vector.broadcast %83 : vector<1x1xf32> to vector<1x128xf32>
    %c0_31 = arith.constant 0 : index
    %c0_32 = arith.constant 0 : index
    %85 = vector.load %arg6[%c0_31, %c0_32] : memref<1x128xf32, #tpu.memory_space<vmem>>, vector<1x128xf32>
    tpu.vector_store %arg6[%c0_31, %c0_32], %84 {strides = array<i32>} : memref<1x128xf32, #tpu.memory_space<vmem>>, vector<1x128xf32>,
    return
  }
  func.func @transform_0(%arg0: i32) -> (i32, i32, i32) {
    %c0_i32 = arith.constant 0 : i32
    %c0_i32_0 = arith.constant 0 : i32
    %c0_i32_1 = arith.constant 0 : i32
    return %arg0, %c0_i32, %c0_i32_0 : i32, i32, i32
  }
  func.func @transform_1(%arg0: i32) -> (i32, i32, i32) {
    %c0_i32 = arith.constant 0 : i32
    %c0_i32_0 = arith.constant 0 : i32
    %c0_i32_1 = arith.constant 0 : i32
    return %arg0, %c0_i32, %c0_i32_0 : i32, i32, i32
  }
  func.func @transform_2(%arg0: i32) -> (i32, i32, i32) {
    %c0_i32 = arith.constant 0 : i32
    %c0_i32_0 = arith.constant 0 : i32
    %c0_i32_1 = arith.constant 0 : i32
    return %arg0, %c0_i32, %c0_i32_0 : i32, i32, i32
  }
  func.func @transform_3(%arg0: i32) -> (i32, i32) {
    %c0_i32 = arith.constant 0 : i32
    %c0_i32_0 = arith.constant 0 : i32
    return %arg0, %c0_i32 : i32, i32
  }
  func.func @transform_4(%arg0: i32) -> (i32, i32) {
    %c0_i32 = arith.constant 0 : i32
    %c0_i32_0 = arith.constant 0 : i32
    return %arg0, %c0_i32 : i32, i32
  }
  func.func @transform_5(%arg0: i32) -> (i32, i32) {
    %c0_i32 = arith.constant 0 : i32
    %c0_i32_0 = arith.constant 0 : i32
    return %arg0, %c0_i32 : i32, i32
  }
}

module attributes {stable_mosaic.version = 11 : i64} {
  func.func @_apply_kernel(%arg0: i32, %arg1: memref<2xf32, #tpu.memory_space<smem>>, %arg2: memref<8x256xf32, #tpu.memory_space<vmem>>, %arg3: memref<8x256xi8, #tpu.memory_space<vmem>>, %arg4: memref<8x256xf32, #tpu.memory_space<vmem>>, %arg5: memref<8x256xf32, #tpu.memory_space<vmem>>) attributes {dimension_semantics = [#tpu.dimension_semantics<parallel>], iteration_bounds = array<i64: 1>, scalar_prefetch = 0 : i64, scratch_operands = 0 : i64, tpu.core_type = #tpu.core_type<tc>, window_params = [{transform_indices = @transform_0, window_bounds = array<i64: 2>}, {transform_indices = @transform_1, window_bounds = array<i64: 8, 256>}, {transform_indices = @transform_2, window_bounds = array<i64: 8, 256>}, {transform_indices = @transform_3, window_bounds = array<i64: 8, 256>}, {transform_indices = @transform_4, window_bounds = array<i64: 8, 256>}]} {
    %c0 = arith.constant 0 : index
    %0 = memref.load %arg1[%c0] : memref<2xf32, #tpu.memory_space<smem>>
    %c1 = arith.constant 1 : index
    %1 = memref.load %arg1[%c1] : memref<2xf32, #tpu.memory_space<smem>>
    %c0_0 = arith.constant 0 : index
    %c0_1 = arith.constant 0 : index
    %2 = vector.load %arg3[%c0_0, %c0_1] : memref<8x256xi8, #tpu.memory_space<vmem>>, vector<8x256xi8>
    %3 = arith.sitofp %2 : vector<8x256xi8> to vector<8x256xf32>
    %c0_2 = arith.constant 0 : index
    %c0_3 = arith.constant 0 : index
    %4 = vector.load %arg2[%c0_2, %c0_3] : memref<8x256xf32, #tpu.memory_space<vmem>>, vector<8x256xf32>
    %5 = vector.broadcast %0 : f32 to vector<8x256xf32>
    %6 = arith.mulf %3, %5 : vector<8x256xf32>
    %7 = arith.mulf %4, %6 : vector<8x256xf32>
    %c0_4 = arith.constant 0 : index
    %c0_5 = arith.constant 0 : index
    %8 = vector.load %arg4[%c0_4, %c0_5] : memref<8x256xf32, #tpu.memory_space<vmem>>, vector<8x256xf32>
    %9 = vector.broadcast %1 : f32 to vector<8x256xf32>
    %10 = arith.mulf %9, %8 : vector<8x256xf32>
    %cst = arith.constant 1.000000e+00 : f32
    %11 = vector.broadcast %cst : f32 to vector<8x256xf32>
    %12 = arith.subf %11, %3 : vector<8x256xf32>
    %13 = arith.mulf %10, %12 : vector<8x256xf32>
    %14 = arith.addf %7, %13 : vector<8x256xf32>
    %c0_6 = arith.constant 0 : index
    %c0_7 = arith.constant 0 : index
    %15 = vector.load %arg5[%c0_6, %c0_7] : memref<8x256xf32, #tpu.memory_space<vmem>>, vector<8x256xf32>
    tpu.vector_store %arg5[%c0_6, %c0_7], %14 {strides = array<i32>} : memref<8x256xf32, #tpu.memory_space<vmem>>, vector<8x256xf32>,
    return
  }
  func.func @transform_0(%arg0: i32) -> i32 {
    %c0_i32 = arith.constant 0 : i32
    %c0_i32_0 = arith.constant 0 : i32
    return %c0_i32 : i32
  }
  func.func @transform_1(%arg0: i32) -> (i32, i32) {
    %c0_i32 = arith.constant 0 : i32
    %c0_i32_0 = arith.constant 0 : i32
    return %arg0, %c0_i32 : i32, i32
  }
  func.func @transform_2(%arg0: i32) -> (i32, i32) {
    %c0_i32 = arith.constant 0 : i32
    %c0_i32_0 = arith.constant 0 : i32
    return %arg0, %c0_i32 : i32, i32
  }
  func.func @transform_3(%arg0: i32) -> (i32, i32) {
    %c0_i32 = arith.constant 0 : i32
    %c0_i32_0 = arith.constant 0 : i32
    return %arg0, %c0_i32 : i32, i32
  }
  func.func @transform_4(%arg0: i32) -> (i32, i32) {
    %c0_i32 = arith.constant 0 : i32
    %c0_i32_0 = arith.constant 0 : i32
    return %arg0, %c0_i32 : i32, i32
  }
}

</mosaic_0001>

<llo_original>
// kernel: disout_pallas.3
$region0: #{disout_pallas.3}
  #allocation0 [shape = 'u32[]', space=smem, size = 0x4, offset = 0x4, fixed_abs, tag = 'smem constant byte address 0x4 - core index']
  #allocation1 [shape = 'u32[144,128]{1,0:T(1,128)}', space=vmem, size = 0x12000, scoped, tag = 'internal scratch']
  %s0 = inlined_call_operand.vmem [shape: f32[2], index: 0, kind: input, shape index: {}]
  %s1 = inlined_call_operand.vmem [shape: f32[8,256], index: 1, kind: input, shape index: {}]
  %s2 = inlined_call_operand.vmem [shape: s8[8,256], index: 2, kind: input, shape index: {}]
  %s3 = inlined_call_operand.vmem [shape: f32[8,256], index: 3, kind: input, shape index: {}]
  %s4 = inlined_call_operand.vmem [shape: f32[8,256], index: 4, kind: output, shape index: {}]
  %s5 = sld [smem:[#allocation0]]
  $region30: #{disout_pallas.3} parent=0
    _
  %s7 = ssub.s32 1, %s5
  %s8 = scalar_select 0, %s7, %s5
  $region1: #{disout_pallas.3} parent=0
    #allocation2 [shape = 'u8[512]{0}', space=smem, size = 0x200, scoped, tag = 'input window, operand 0, single buffered']
    #allocation3 [shape = 's32[1]{0}', space=sflag, size = 0x4, scoped, tag = 'scoped memory for disout_pallas.3']
    %9 = vsyncpa [#allocation3], 0
    // Predicated region
    $region2: #{disout_pallas.3} parent=1 // pred_check
      _
    $region3: #{disout_pallas.3} parent=1 // pred_check_branch
      %11 = sbr.rel (0) target = $region5
    $region4: #{disout_pallas.3} parent=1 // pred_region
      %s13 = ssub.s32 16, 16
      %14 = vsyncadd [#allocation3], %s13
      %s16 = sshll.u32 %s0, 4
      %s17 = int_to_ptr.vmem [resolvable:$true] %s16
      %19 = dma.vmem_to_smem %s17, 16, [#allocation2], [#allocation3]
    $region5: #{disout_pallas.3} parent=1 // pred_fallthru
      _
    // Predicated region
    $region6: #{disout_pallas.3} parent=1 // pred_check
      _
    $region7: #{disout_pallas.3} parent=1 // pred_check_branch
      %21 = sbr.rel (0) target = $region9
    $region8: #{disout_pallas.3} parent=1 // pred_region
      _
    $region9: #{disout_pallas.3} parent=1 // pred_fallthru
      _
    // Predicated region
    $region10: #{disout_pallas.3} parent=1 // pred_check
      _
    $region11: #{disout_pallas.3} parent=1 // pred_check_branch
      %23 = sbr.rel (0) target = $region13
    $region12: #{disout_pallas.3} parent=1 // pred_region
      _
    $region13: #{disout_pallas.3} parent=1 // pred_fallthru
      _
    // Predicated region
    $region14: #{disout_pallas.3} parent=1 // pred_check
      _
    $region15: #{disout_pallas.3} parent=1 // pred_check_branch
      %25 = sbr.rel (0) target = $region17
    $region16: #{disout_pallas.3} parent=1 // pred_region
      _
    $region17: #{disout_pallas.3} parent=1 // pred_fallthru
      _
    // Predicated region
    $region18: #{disout_pallas.3} parent=1 // pred_check
      _
    $region19: #{disout_pallas.3} parent=1 // pred_check_branch
      %27 = sbr.rel (0) target = $region21
    $region20: #{disout_pallas.3} parent=1 // pred_region
      %28 = dma.done [#allocation3], 16
    $region21: #{disout_pallas.3} parent=1 // pred_fallthru
      _
    %29 = sfence
    %s30 = sld [smem:[#allocation2]]
    %s31 = sld [smem:[#allocation2 + $0x1]]
    %v32 = vld [vmem:[%s2] sm:$0xf]
    %v33 = vunpack.c.0.s8 %v32
    %v34 = vunpack.c.1.s8 %v32
    %v35 = vcvt.s32.f32 %v33
    %v36 = vcvt.s32.f32 %v34
    %v37 = vld [vmem:[%s1] sm:$0xff]
    %v38 = vld [vmem:[%s1 + $0x8] sm:$0xff]
    %v39 = vstv %s30
    %v40 = vmul.f32 %v35, %v39
    %v41 = vmul.f32 %v36, %v39
    %v42 = vmul.f32 %v37, %v40
    %v43 = vmul.f32 %v38, %v41
    %v44 = vld [vmem:[%s3] sm:$0xff]
    %v45 = vld [vmem:[%s3 + $0x8] sm:$0xff]
    %v46 = vstv %s31
    %v47 = vmul.f32 %v46, %v44
    %v48 = vmul.f32 %v46, %v45
    %v49 = vsub.f32 1.0, %v35
    %v50 = vsub.f32 1.0, %v36
    %v51 = vmul.f32 %v47, %v49
    %v52 = vmul.f32 %v48, %v50
    %v53 = vadd.f32 %v42, %v51
    %v54 = vadd.f32 %v43, %v52
    %55 = vst [vmem:[%s4] sm:$0xff] %v53
    %56 = vst [vmem:[%s4 + $0x8] sm:$0xff] %v54
    // Predicated region
    $region22: #{disout_pallas.3} parent=1 // pred_check
      _
    $region23: #{disout_pallas.3} parent=1 // pred_check_branch
      %58 = sbr.rel (0) target = $region25
    $region24: #{disout_pallas.3} parent=1 // pred_region
      _
    $region25: #{disout_pallas.3} parent=1 // pred_fallthru
      _
    // Predicated region
    $region26: #{disout_pallas.3} parent=1 // pred_check
      _
    $region27: #{disout_pallas.3} parent=1 // pred_check_branch
      %60 = sbr.rel (0) target = $region29
    $region28: #{disout_pallas.3} parent=1 // pred_region
      _
    $region29: #{disout_pallas.3} parent=1 // pred_fallthru
      _
    %61 = vsyncpa [#allocation3], 1

// kernel: disout_pallas.2
$region0: #{disout_pallas.2}
  #allocation0 [shape = 'u32[]', space=smem, size = 0x4, offset = 0x4, fixed_abs, tag = 'smem constant byte address 0x4 - core index']
  #allocation1 [shape = 'u32[144,128]{1,0:T(1,128)}', space=vmem, size = 0x12000, scoped, tag = 'internal scratch']
  #allocation2 [shape = 'f32[8,25,25]{2,1,0:T(8,128)}', space=vmem, size = 0x20000, scoped, tag = 'scratch operand']
  %s0 = inlined_call_operand.vmem [shape: f32[8,16,16], index: 0, kind: input, shape index: {}]
  %s1 = inlined_call_operand.vmem [shape: f32[8,16,16], index: 1, kind: input, shape index: {}]
  %s2 = inlined_call_operand.vmem [shape: s8[8,16,16], index: 2, kind: output, shape index: {0}]
  %s3 = inlined_call_operand.vmem [shape: f32[1,128], index: 3, kind: output, shape index: {1}]
  %s4 = inlined_call_operand.vmem [shape: f32[1,128], index: 4, kind: output, shape index: {2}]
  %s5 = inlined_call_operand.vmem [shape: f32[1,128], index: 5, kind: output, shape index: {3}]
  %6 = xla_tuple %s2, %s3, %s4, %s5
  %s7 = sld [smem:[#allocation0]]
  $region42: #{disout_pallas.2} parent=0
    _
  %s9 = ssub.s32 1, %s7
  %s10 = scalar_select 0, %s9, %s7
  // Predicated region
  $region2: #{disout_pallas.2} parent=0 // pred_check
    _
  $region3: #{disout_pallas.2} parent=0 // pred_check_branch
    %12 = sbr.rel (0) target = $region5
  $region4: #{disout_pallas.2} parent=0 // pred_region
    _
  $region5: #{disout_pallas.2} parent=0 // pred_fallthru
    _
  // Predicated region
  $region6: #{disout_pallas.2} parent=0 // pred_check
    _
  $region7: #{disout_pallas.2} parent=0 // pred_check_branch
    %14 = sbr.rel (0) target = $region9
  $region8: #{disout_pallas.2} parent=0 // pred_region
    _
  $region9: #{disout_pallas.2} parent=0 // pred_fallthru
    _
  %v15 = vld [vmem:[%s0] sm:$0xff]
  %v16 = vld [vmem:[%s0 + $0x8] sm:$0xff]
  %v17 = vld [vmem:[%s0 + $0x10] sm:$0xff]
  %v18 = vld [vmem:[%s0 + $0x18] sm:$0xff]
  %v19 = vld [vmem:[%s0 + $0x20] sm:$0xff]
  %v20 = vld [vmem:[%s0 + $0x28] sm:$0xff]
  %v21 = vld [vmem:[%s0 + $0x30] sm:$0xff]
  %v22 = vld [vmem:[%s0 + $0x38] sm:$0xff]
  %v23 = vld [vmem:[%s0 + $0x40] sm:$0xff]
  %v24 = vld [vmem:[%s0 + $0x48] sm:$0xff]
  %v25 = vld [vmem:[%s0 + $0x50] sm:$0xff]
  %v26 = vld [vmem:[%s0 + $0x58] sm:$0xff]
  %v27 = vld [vmem:[%s0 + $0x60] sm:$0xff]
  %v28 = vld [vmem:[%s0 + $0x68] sm:$0xff]
  %v29 = vld [vmem:[%s0 + $0x70] sm:$0xff]
  %v30 = vld [vmem:[%s0 + $0x78] sm:$0xff]
  %v31 = vld [vmem:[%s1] sm:$0xff]
  %v32 = vld [vmem:[%s1 + $0x8] sm:$0xff]
  %v33 = vld [vmem:[%s1 + $0x10] sm:$0xff]
  %v34 = vld [vmem:[%s1 + $0x18] sm:$0xff]
  %v35 = vld [vmem:[%s1 + $0x20] sm:$0xff]
  %v36 = vld [vmem:[%s1 + $0x28] sm:$0xff]
  %v37 = vld [vmem:[%s1 + $0x30] sm:$0xff]
  %v38 = vld [vmem:[%s1 + $0x38] sm:$0xff]
  %v39 = vld [vmem:[%s1 + $0x40] sm:$0xff]
  %v40 = vld [vmem:[%s1 + $0x48] sm:$0xff]
  %v41 = vld [vmem:[%s1 + $0x50] sm:$0xff]
  %v42 = vld [vmem:[%s1 + $0x58] sm:$0xff]
  %v43 = vld [vmem:[%s1 + $0x60] sm:$0xff]
  %v44 = vld [vmem:[%s1 + $0x68] sm:$0xff]
  %v45 = vld [vmem:[%s1 + $0x70] sm:$0xff]
  %v46 = vld [vmem:[%s1 + $0x78] sm:$0xff]
  %v47 = vlaneseq
  %v48 = vshrl.u32 %v47, 7
  %v49 = vadd.s32 %v48, 8
  %v50 = vlaneseq
  %v51 = vand.u32 %v50, 127
  %vm52 = vcmp.ge.s32.totalorder %v48, 5
  %vm53 = vcmp.ge.s32.totalorder %v49, 5
  %vm54 = vcmp.lt.s32.totalorder %v48, 12
  %vm55 = vcmp.lt.s32.totalorder %v49, 12
  %vm56 = vmand %vm52, %vm54
  %vm57 = vmand %vm53, %vm55
  %vm58 = vcmp.ge.s32.totalorder %v51, 5
  %vm59 = vmand %vm56, %vm58
  %vm60 = vmand %vm57, %vm58
  %vm61 = vcmp.lt.s32.totalorder %v51, 12
  %vm62 = vmand %vm59, %vm61
  %vm63 = vmand %vm60, %vm61
  %v64 = vsel %vm62, 1, 0
  %v65 = vsel %vm63, 1, 0
  %v66 = vcvt.s32.f32 %v64
  %v67 = vcvt.s32.f32 %v65
  %v68 = vsub.f32 1.0, %v66
  %v69 = vsub.f32 1.0, %v67
  %v70 = vadd.f32 %v68, 0.97387755
  %v71 = vadd.f32 %v69, 0.97387755
  %v72 = vadd.f32 %v70, %v15
  %v73 = vadd.f32 %v71, %v16
  %v74 = vadd.f32 %v70, %v17
  %v75 = vadd.f32 %v71, %v18
  %v76 = vadd.f32 %v70, %v19
  %v77 = vadd.f32 %v71, %v20
  %v78 = vadd.f32 %v70, %v21
  %v79 = vadd.f32 %v71, %v22
  %v80 = vadd.f32 %v70, %v23
  %v81 = vadd.f32 %v71, %v24
  %v82 = vadd.f32 %v70, %v25
  %v83 = vadd.f32 %v71, %v26
  %v84 = vadd.f32 %v70, %v27
  %v85 = vadd.f32 %v71, %v28
  %v86 = vadd.f32 %v70, %v29
  %v87 = vadd.f32 %v71, %v30
  %vm88 = vcmp.ge.f32.partialorder %v72, 1.0
  %vm89 = vcmp.ge.f32.partialorder %v73, 1.0
  %vm90 = vcmp.ge.f32.partialorder %v74, 1.0
  %vm91 = vcmp.ge.f32.partialorder %v75, 1.0
  %vm92 = vcmp.ge.f32.partialorder %v76, 1.0
  %vm93 = vcmp.ge.f32.partialorder %v77, 1.0
  %vm94 = vcmp.ge.f32.partialorder %v78, 1.0
  %vm95 = vcmp.ge.f32.partialorder %v79, 1.0
  %vm96 = vcmp.ge.f32.partialorder %v80, 1.0
  %vm97 = vcmp.ge.f32.partialorder %v81, 1.0
  %vm98 = vcmp.ge.f32.partialorder %v82, 1.0
  %vm99 = vcmp.ge.f32.partialorder %v83, 1.0
  %vm100 = vcmp.ge.f32.partialorder %v84, 1.0
  %vm101 = vcmp.ge.f32.partialorder %v85, 1.0
  %vm102 = vcmp.ge.f32.partialorder %v86, 1.0
  %vm103 = vcmp.ge.f32.partialorder %v87, 1.0
  %v104 = vsel %vm88, 1, 0
  %v105 = vsel %vm89, 1, 0
  %v106 = vsel %vm90, 1, 0
  %v107 = vsel %vm91, 1, 0
  %v108 = vsel %vm92, 1, 0
  %v109 = vsel %vm93, 1, 0
  %v110 = vsel %vm94, 1, 0
  %v111 = vsel %vm95, 1, 0
  %v112 = vsel %vm96, 1, 0
  %v113 = vsel %vm97, 1, 0
  %v114 = vsel %vm98, 1, 0
  %v115 = vsel %vm99, 1, 0
  %v116 = vsel %vm100, 1, 0
  %v117 = vsel %vm101, 1, 0
  %v118 = vsel %vm102, 1, 0
  %v119 = vsel %vm103, 1, 0
  %v120 = vcvt.s32.f32 %v104
  %v121 = vcvt.s32.f32 %v105
  %v122 = vcvt.s32.f32 %v106
  %v123 = vcvt.s32.f32 %v107
  %v124 = vcvt.s32.f32 %v108
  %v125 = vcvt.s32.f32 %v109
  %v126 = vcvt.s32.f32 %v110
  %v127 = vcvt.s32.f32 %v111
  %v128 = vcvt.s32.f32 %v112
  %v129 = vcvt.s32.f32 %v113
  %v130 = vcvt.s32.f32 %v114
  %v131 = vcvt.s32.f32 %v115
  %v132 = vcvt.s32.f32 %v116
  %v133 = vcvt.s32.f32 %v117
  %v134 = vcvt.s32.f32 %v118
  %v135 = vcvt.s32.f32 %v119
  %vm136 = vcmask 203776
  %137 = vst.msk [vmem:[#allocation2] sm:$0xff] %vm136, 1.0
  %138 = vst.msk [vmem:[#allocation2 + $0x8] sm:$0xff] %vm136, 1.0
  %139 = vst.msk [vmem:[#allocation2 + $0x10] sm:$0xff] %vm136, 1.0
  %vm140 = vcmask 196608
  %141 = vst.msk [vmem:[#allocation2 + $0x18] sm:$0x1] %vm140, 1.0
  %142 = vst.msk [vmem:[#allocation2 + $0x20] sm:$0xff] %vm136, 1.0
  %143 = vst.msk [vmem:[#allocation2 + $0x28] sm:$0xff] %vm136, 1.0
  %144 = vst.msk [vmem:[#allocation2 + $0x30] sm:$0xff] %vm136, 1.0
  %145 = vst.msk [vmem:[#allocation2 + $0x38] sm:$0x1] %vm140, 1.0
  %146 = vst.msk [vmem:[#allocation2 + $0x40] sm:$0xff] %vm136, 1.0
  %147 = vst.msk [vmem:[#allocation2 + $0x48] sm:$0xff] %vm136, 1.0
  %148 = vst.msk [vmem:[#allocation2 + $0x50] sm:$0xff] %vm136, 1.0
  %149 = vst.msk [vmem:[#allocation2 + $0x58] sm:$0x1] %vm140, 1.0
  %150 = vst.msk [vmem:[#allocation2 + $0x60] sm:$0xff] %vm136, 1.0
  %151 = vst.msk [vmem:[#allocation2 + $0x68] sm:$0xff] %vm136, 1.0
  %152 = vst.msk [vmem:[#allocation2 + $0x70] sm:$0xff] %vm136, 1.0
  %153 = vst.msk [vmem:[#allocation2 + $0x78] sm:$0x1] %vm140, 1.0
  %154 = vst.msk [vmem:[#allocation2 + $0x80] sm:$0xff] %vm136, 1.0
  %155 = vst.msk [vmem:[#allocation2 + $0x88] sm:$0xff] %vm136, 1.0
  %156 = vst.msk [vmem:[#allocation2 + $0x90] sm:$0xff] %vm136, 1.0
  %157 = vst.msk [vmem:[#allocation2 + $0x98] sm:$0x1] %vm140, 1.0
  %158 = vst.msk [vmem:[#allocation2 + $0xa0] sm:$0xff] %vm136, 1.0
  %159 = vst.msk [vmem:[#allocation2 + $0xa8] sm:$0xff] %vm136, 1.0
  %160 = vst.msk [vmem:[#allocation2 + $0xb0] sm:$0xff] %vm136, 1.0
  %161 = vst.msk [vmem:[#allocation2 + $0xb8] sm:$0x1] %vm140, 1.0
  %162 = vst.msk [vmem:[#allocation2 + $0xc0] sm:$0xff] %vm136, 1.0
  %163 = vst.msk [vmem:[#allocation2 + $0xc8] sm:$0xff] %vm136, 1.0
  %164 = vst.msk [vmem:[#allocation2 + $0xd0] sm:$0xff] %vm136, 1.0
  %165 = vst.msk [vmem:[#allocation2 + $0xd8] sm:$0x1] %vm140, 1.0
  %166 = vst.msk [vmem:[#allocation2 + $0xe0] sm:$0xff] %vm136, 1.0
  %167 = vst.msk [vmem:[#allocation2 + $0xe8] sm:$0xff] %vm136, 1.0
  %168 = vst.msk [vmem:[#allocation2 + $0xf0] sm:$0xff] %vm136, 1.0
  %169 = vst.msk [vmem:[#allocation2 + $0xf8] sm:$0x1] %vm140, 1.0
  %186 = vrot.lane.b32.xlu0 %v120, 5
  %v187 = vpop.permute.xlu0 %186
  %188 = vrot.lane.b32.xlu0 %v121, 5
  %v189 = vpop.permute.xlu0 %188
  %190 = vrot.lane.b32.xlu0 %v122, 5
  %v191 = vpop.permute.xlu0 %190
  %192 = vrot.lane.b32.xlu0 %v123, 5
  %v193 = vpop.permute.xlu0 %192
  %194 = vrot.lane.b32.xlu0 %v124, 5
  %v195 = vpop.permute.xlu0 %194
  %196 = vrot.lane.b32.xlu0 %v125, 5
  %v197 = vpop.permute.xlu0 %196
  %198 = vrot.lane.b32.xlu0 %v126, 5
  %v199 = vpop.permute.xlu0 %198
  %200 = vrot.lane.b32.xlu0 %v127, 5
  %v201 = vpop.permute.xlu0 %200
  %202 = vrot.lane.b32.xlu0 %v128, 5
  %v203 = vpop.permute.xlu0 %202
  %204 = vrot.lane.b32.xlu0 %v129, 5
  %v205 = vpop.permute.xlu0 %204
  %206 = vrot.lane.b32.xlu0 %v130, 5
  %v207 = vpop.permute.xlu0 %206
  %208 = vrot.lane.b32.xlu0 %v131, 5
  %v209 = vpop.permute.xlu0 %208
  %210 = vrot.lane.b32.xlu0 %v132, 5
  %v211 = vpop.permute.xlu0 %210
  %212 = vrot.lane.b32.xlu0 %v133, 5
  %v213 = vpop.permute.xlu0 %212
  %214 = vrot.lane.b32.xlu0 %v134, 5
  %v215 = vpop.permute.xlu0 %214
  %216 = vrot.lane.b32.xlu0 %v135, 5
  %v217 = vpop.permute.xlu0 %216
  %vm234 = vcmask 171048
  %235 = vst.msk [vmem:[#allocation2 + $0x5] sm:$0xff] %vm234, %v187
  %236 = vst.msk [vmem:[#allocation2 + $0xd] sm:$0xff] %vm234, %v189
  %237 = vst.msk [vmem:[#allocation2 + $0x25] sm:$0xff] %vm234, %v191
  %238 = vst.msk [vmem:[#allocation2 + $0x2d] sm:$0xff] %vm234, %v193
  %239 = vst.msk [vmem:[#allocation2 + $0x45] sm:$0xff] %vm234, %v195
  %240 = vst.msk [vmem:[#allocation2 + $0x4d] sm:$0xff] %vm234, %v197
  %241 = vst.msk [vmem:[#allocation2 + $0x65] sm:$0xff] %vm234, %v199
  %242 = vst.msk [vmem:[#allocation2 + $0x6d] sm:$0xff] %vm234, %v201
  %243 = vst.msk [vmem:[#allocation2 + $0x85] sm:$0xff] %vm234, %v203
  %244 = vst.msk [vmem:[#allocation2 + $0x8d] sm:$0xff] %vm234, %v205
  %245 = vst.msk [vmem:[#allocation2 + $0xa5] sm:$0xff] %vm234, %v207
  %246 = vst.msk [vmem:[#allocation2 + $0xad] sm:$0xff] %vm234, %v209
  %247 = vst.msk [vmem:[#allocation2 + $0xc5] sm:$0xff] %vm234, %v211
  %248 = vst.msk [vmem:[#allocation2 + $0xcd] sm:$0xff] %vm234, %v213
  %249 = vst.msk [vmem:[#allocation2 + $0xe5] sm:$0xff] %vm234, %v215
  %250 = vst.msk [vmem:[#allocation2 + $0xed] sm:$0xff] %vm234, %v217
  %v251 = vld [vmem:[#allocation2] sm:$0xff]
  %v252 = vld [vmem:[#allocation2 + $0x8] sm:$0xff]
  %v253 = vld [vmem:[#allocation2 + $0x10] sm:$0xff]
  %v254 = vld [vmem:[#allocation2 + $0x18] sm:$0x1]
  %v255 = vld [vmem:[#allocation2 + $0x20] sm:$0xff]
  %v256 = vld [vmem:[#allocation2 + $0x28] sm:$0xff]
  %v257 = vld [vmem:[#allocation2 + $0x30] sm:$0xff]
  %v258 = vld [vmem:[#allocation2 + $0x38] sm:$0x1]
  %v259 = vld [vmem:[#allocation2 + $0x40] sm:$0xff]
  %v260 = vld [vmem:[#allocation2 + $0x48] sm:$0xff]
  %v261 = vld [vmem:[#allocation2 + $0x50] sm:$0xff]
  %v262 = vld [vmem:[#allocation2 + $0x58] sm:$0x1]
  %v263 = vld [vmem:[#allocation2 + $0x60] sm:$0xff]
  %v264 = vld [vmem:[#allocation2 + $0x68] sm:$0xff]
  %v265 = vld [vmem:[#allocation2 + $0x70] sm:$0xff]
  %v266 = vld [vmem:[#allocation2 + $0x78] sm:$0x1]
  %v267 = vld [vmem:[#allocation2 + $0x80] sm:$0xff]
  %v268 = vld [vmem:[#allocation2 + $0x88] sm:$0xff]
  %v269 = vld [vmem:[#allocation2 + $0x90] sm:$0xff]
  %v270 = vld [vmem:[#allocation2 + $0x98] sm:$0x1]
  %v271 = vld [vmem:[#allocation2 + $0xa0] sm:$0xff]
  %v272 = vld [vmem:[#allocation2 + $0xa8] sm:$0xff]
  %v273 = vld [vmem:[#allocation2 + $0xb0] sm:$0xff]
  %v274 = vld [vmem:[#allocation2 + $0xb8] sm:$0x1]
  %v275 = vld [vmem:[#allocation2 + $0xc0] sm:$0xff]
  %v276 = vld [vmem:[#allocation2 + $0xc8] sm:$0xff]
  %v277 = vld [vmem:[#allocation2 + $0xd0] sm:$0xff]
  %v278 = vld [vmem:[#allocation2 + $0xd8] sm:$0x1]
  %v279 = vld [vmem:[#allocation2 + $0xe0] sm:$0xff]
  %v280 = vld [vmem:[#allocation2 + $0xe8] sm:$0xff]
  %v281 = vld [vmem:[#allocation2 + $0xf0] sm:$0xff]
  %v282 = vld [vmem:[#allocation2 + $0xf8] sm:$0x1]
  %vm315 = vcmask 1046528
  %v316 = vrot.slane %v251, 1
  %v317 = vrot.slane %v252, 1
  %v318 = vsel %vm315, %v316, %v317
  %v319 = vrot.slane %v253, 1
  %v320 = vsel %vm315, %v317, %v319
  %v321 = vrot.slane %v254, 1
  %v322 = vsel %vm315, %v319, %v321
  %v323 = vrot.slane %v255, 1
  %v324 = vrot.slane %v256, 1
  %v325 = vsel %vm315, %v323, %v324
  %v326 = vrot.slane %v257, 1
  %v327 = vsel %vm315, %v324, %v326
  %v328 = vrot.slane %v258, 1
  %v329 = vsel %vm315, %v326, %v328
  %v330 = vrot.slane %v259, 1
  %v331 = vrot.slane %v260, 1
  %v332 = vsel %vm315, %v330, %v331
  %v333 = vrot.slane %v261, 1
  %v334 = vsel %vm315, %v331, %v333
  %v335 = vrot.slane %v262, 1
  %v336 = vsel %vm315, %v333, %v335
  %v337 = vrot.slane %v263, 1
  %v338 = vrot.slane %v264, 1
  %v339 = vsel %vm315, %v337, %v338
  %v340 = vrot.slane %v265, 1
  %v341 = vsel %vm315, %v338, %v340
  %v342 = vrot.slane %v266, 1
  %v343 = vsel %vm315, %v340, %v342
  %v344 = vrot.slane %v267, 1
  %v345 = vrot.slane %v268, 1
  %v346 = vsel %vm315, %v344, %v345
  %v347 = vrot.slane %v269, 1
  %v348 = vsel %vm315, %v345, %v347
  %v349 = vrot.slane %v270, 1
  %v350 = vsel %vm315, %v347, %v349
  %v351 = vrot.slane %v271, 1
  %v352 = vrot.slane %v272, 1
  %v353 = vsel %vm315, %v351, %v352
  %v354 = vrot.slane %v273, 1
  %v355 = vsel %vm315, %v352, %v354
  %v356 = vrot.slane %v274, 1
  %v357 = vsel %vm315, %v354, %v356
  %v358 = vrot.slane %v275, 1
  %v359 = vrot.slane %v276, 1
  %v360 = vsel %vm315, %v358, %v359
  %v361 = vrot.slane %v277, 1
  %v362 = vsel %vm315, %v359, %v361
  %v363 = vrot.slane %v278, 1
  %v364 = vsel %vm315, %v361, %v363
  %v365 = vrot.slane %v279, 1
  %v366 = vrot.slane %v280, 1
  %v367 = vsel %vm315, %v365, %v366
  %v368 = vrot.slane %v281, 1
  %v369 = vsel %vm315, %v366, %v368
  %v370 = vrot.slane %v282, 1
  %v371 = vsel %vm315, %v368, %v370
  %v396 = vmin.f32 %v251, %v318
  %v397 = vmin.f32 %v252, %v320
  %v398 = vmin.f32 %v253, %v322
  %v399 = vmin.f32 %v255, %v325
  %v400 = vmin.f32 %v256, %v327
  %v401 = vmin.f32 %v257, %v329
  %v402 = vmin.f32 %v259, %v332
  %v403 = vmin.f32 %v260, %v334
  %v404 = vmin.f32 %v261, %v336
  %v405 = vmin.f32 %v263, %v339
  %v406 = vmin.f32 %v264, %v341
  %v407 = vmin.f32 %v265, %v343
  %v408 = vmin.f32 %v267, %v346
  %v409 = vmin.f32 %v268, %v348
  %v410 = vmin.f32 %v269, %v350
  %v411 = vmin.f32 %v271, %v353
  %v412 = vmin.f32 %v272, %v355
  %v413 = vmin.f32 %v273, %v357
  %v414 = vmin.f32 %v275, %v360
  %v415 = vmin.f32 %v276, %v362
  %v416 = vmin.f32 %v277, %v364
  %v417 = vmin.f32 %v279, %v367
  %v418 = vmin.f32 %v280, %v369
  %v419 = vmin.f32 %v281, %v371
  %vm444 = vcmask 1045504
  %v445 = vrot.slane %v396, 2
  %v446 = vrot.slane %v397, 2
  %v447 = vsel %vm444, %v445, %v446
  %v448 = vrot.slane %v398, 2
  %v449 = vsel %vm444, %v446, %v448
  %v450 = vrot.slane %v399, 2
  %v451 = vrot.slane %v400, 2
  %v452 = vsel %vm444, %v450, %v451
  %v453 = vrot.slane %v401, 2
  %v454 = vsel %vm444, %v451, %v453
  %v455 = vrot.slane %v402, 2
  %v456 = vrot.slane %v403, 2
  %v457 = vsel %vm444, %v455, %v456
  %v458 = vrot.slane %v404, 2
  %v459 = vsel %vm444, %v456, %v458
  %v460 = vrot.slane %v405, 2
  %v461 = vrot.slane %v406, 2
  %v462 = vsel %vm444, %v460, %v461
  %v463 = vrot.slane %v407, 2
  %v464 = vsel %vm444, %v461, %v463
  %v465 = vrot.slane %v408, 2
  %v466 = vrot.slane %v409, 2
  %v467 = vsel %vm444, %v465, %v466
  %v468 = vrot.slane %v410, 2
  %v469 = vsel %vm444, %v466, %v468
  %v470 = vrot.slane %v411, 2
  %v471 = vrot.slane %v412, 2
  %v472 = vsel %vm444, %v470, %v471
  %v473 = vrot.slane %v413, 2
  %v474 = vsel %vm444, %v471, %v473
  %v475 = vrot.slane %v414, 2
  %v476 = vrot.slane %v415, 2
  %v477 = vsel %vm444, %v475, %v476
  %v478 = vrot.slane %v416, 2
  %v479 = vsel %vm444, %v476, %v478
  %v480 = vrot.slane %v417, 2
  %v481 = vrot.slane %v418, 2
  %v482 = vsel %vm444, %v480, %v481
  %v483 = vrot.slane %v419, 2
  %v484 = vsel %vm444, %v481, %v483
  %v509 = vmin.f32 %v396, %v447
  %v510 = vmin.f32 %v397, %v449
  %v511 = vmin.f32 %v398, %v448
  %v512 = vmin.f32 %v399, %v452
  %v513 = vmin.f32 %v400, %v454
  %v514 = vmin.f32 %v401, %v453
  %v515 = vmin.f32 %v402, %v457
  %v516 = vmin.f32 %v403, %v459
  %v517 = vmin.f32 %v404, %v458
  %v518 = vmin.f32 %v405, %v462
  %v519 = vmin.f32 %v406, %v464
  %v520 = vmin.f32 %v407, %v463
  %v521 = vmin.f32 %v408, %v467
  %v522 = vmin.f32 %v409, %v469
  %v523 = vmin.f32 %v410, %v468
  %v524 = vmin.f32 %v411, %v472
  %v525 = vmin.f32 %v412, %v474
  %v526 = vmin.f32 %v413, %v473
  %v527 = vmin.f32 %v414, %v477
  %v528 = vmin.f32 %v415, %v479
  %v529 = vmin.f32 %v416, %v478
  %v530 = vmin.f32 %v417, %v482
  %v531 = vmin.f32 %v418, %v484
  %v532 = vmin.f32 %v419, %v483
  %vm557 = vcmask 1043456
  %v558 = vrot.slane %v509, 4
  %v559 = vrot.slane %v510, 4
  %v560 = vsel %vm557, %v558, %v559
  %v561 = vrot.slane %v511, 4
  %v562 = vsel %vm557, %v559, %v561
  %v563 = vrot.slane %v512, 4
  %v564 = vrot.slane %v513, 4
  %v565 = vsel %vm557, %v563, %v564
  %v566 = vrot.slane %v514, 4
  %v567 = vsel %vm557, %v564, %v566
  %v568 = vrot.slane %v515, 4
  %v569 = vrot.slane %v516, 4
  %v570 = vsel %vm557, %v568, %v569
  %v571 = vrot.slane %v517, 4
  %v572 = vsel %vm557, %v569, %v571
  %v573 = vrot.slane %v518, 4
  %v574 = vrot.slane %v519, 4
  %v575 = vsel %vm557, %v573, %v574
  %v576 = vrot.slane %v520, 4
  %v577 = vsel %vm557, %v574, %v576
  %v578 = vrot.slane %v521, 4
  %v579 = vrot.slane %v522, 4
  %v580 = vsel %vm557, %v578, %v579
  %v581 = vrot.slane %v523, 4
  %v582 = vsel %vm557, %v579, %v581
  %v583 = vrot.slane %v524, 4
  %v584 = vrot.slane %v525, 4
  %v585 = vsel %vm557, %v583, %v584
  %v586 = vrot.slane %v526, 4
  %v587 = vsel %vm557, %v584, %v586
  %v588 = vrot.slane %v527, 4
  %v589 = vrot.slane %v528, 4
  %v590 = vsel %vm557, %v588, %v589
  %v591 = vrot.slane %v529, 4
  %v592 = vsel %vm557, %v589, %v591
  %v593 = vrot.slane %v530, 4
  %v594 = vrot.slane %v531, 4
  %v595 = vsel %vm557, %v593, %v594
  %v596 = vrot.slane %v532, 4
  %v597 = vsel %vm557, %v594, %v596
  %v622 = vmin.f32 %v509, %v560
  %v623 = vmin.f32 %v510, %v562
  %v624 = vmin.f32 %v511, %v561
  %v625 = vmin.f32 %v512, %v565
  %v626 = vmin.f32 %v513, %v567
  %v627 = vmin.f32 %v514, %v566
  %v628 = vmin.f32 %v515, %v570
  %v629 = vmin.f32 %v516, %v572
  %v630 = vmin.f32 %v517, %v571
  %v631 = vmin.f32 %v518, %v575
  %v632 = vmin.f32 %v519, %v577
  %v633 = vmin.f32 %v520, %v576
  %v634 = vmin.f32 %v521, %v580
  %v635 = vmin.f32 %v522, %v582
  %v636 = vmin.f32 %v523, %v581
  %v637 = vmin.f32 %v524, %v585
  %v638 = vmin.f32 %v525, %v587
  %v639 = vmin.f32 %v526, %v586
  %v640 = vmin.f32 %v527, %v590
  %v641 = vmin.f32 %v528, %v592
  %v642 = vmin.f32 %v529, %v591
  %v643 = vmin.f32 %v530, %v595
  %v644 = vmin.f32 %v531, %v597
  %v645 = vmin.f32 %v532, %v596
  %v670 = vrot.slane %v622, 2
  %v671 = vrot.slane %v623, 2
  %v672 = vsel %vm444, %v670, %v671
  %v673 = vrot.slane %v624, 2
  %v674 = vsel %vm444, %v671, %v673
  %v675 = vrot.slane %v625, 2
  %v676 = vrot.slane %v626, 2
  %v677 = vsel %vm444, %v675, %v676
  %v678 = vrot.slane %v627, 2
  %v679 = vsel %vm444, %v676, %v678
  %v680 = vrot.slane %v628, 2
  %v681 = vrot.slane %v629, 2
  %v682 = vsel %vm444, %v680, %v681
  %v683 = vrot.slane %v630, 2
  %v684 = vsel %vm444, %v681, %v683
  %v685 = vrot.slane %v631, 2
  %v686 = vrot.slane %v632, 2
  %v687 = vsel %vm444, %v685, %v686
  %v688 = vrot.slane %v633, 2
  %v689 = vsel %vm444, %v686, %v688
  %v690 = vrot.slane %v634, 2
  %v691 = vrot.slane %v635, 2
  %v692 = vsel %vm444, %v690, %v691
  %v693 = vrot.slane %v636, 2
  %v694 = vsel %vm444, %v691, %v693
  %v695 = vrot.slane %v637, 2
  %v696 = vrot.slane %v638, 2
  %v697 = vsel %vm444, %v695, %v696
  %v698 = vrot.slane %v639, 2
  %v699 = vsel %vm444, %v696, %v698
  %v700 = vrot.slane %v640, 2
  %v701 = vrot.slane %v641, 2
  %v702 = vsel %vm444, %v700, %v701
  %v703 = vrot.slane %v642, 2
  %v704 = vsel %vm444, %v701, %v703
  %v705 = vrot.slane %v643, 2
  %v706 = vrot.slane %v644, 2
  %v707 = vsel %vm444, %v705, %v706
  %v708 = vrot.slane %v645, 2
  %v709 = vsel %vm444, %v706, %v708
  %v726 = vmin.f32 %v622, %v672
  %v727 = vmin.f32 %v623, %v674
  %v728 = vmin.f32 %v625, %v677
  %v729 = vmin.f32 %v626, %v679
  %v730 = vmin.f32 %v628, %v682
  %v731 = vmin.f32 %v629, %v684
  %v732 = vmin.f32 %v631, %v687
  %v733 = vmin.f32 %v632, %v689
  %v734 = vmin.f32 %v634, %v692
  %v735 = vmin.f32 %v635, %v694
  %v736 = vmin.f32 %v637, %v697
  %v737 = vmin.f32 %v638, %v699
  %v738 = vmin.f32 %v640, %v702
  %v739 = vmin.f32 %v641, %v704
  %v740 = vmin.f32 %v643, %v707
  %v741 = vmin.f32 %v644, %v709
  %758 = vrot.lane.b32.xlu0 %v726, 127
  %v759 = vpop.permute.xlu0 %758
  %760 = vrot.lane.b32.xlu0 %v727, 127
  %v761 = vpop.permute.xlu0 %760
  %762 = vrot.lane.b32.xlu0 %v728, 127
  %v763 = vpop.permute.xlu0 %762
  %764 = vrot.lane.b32.xlu0 %v729, 127
  %v765 = vpop.permute.xlu0 %764
  %766 = vrot.lane.b32.xlu0 %v730, 127
  %v767 = vpop.permute.xlu0 %766
  %768 = vrot.lane.b32.xlu0 %v731, 127
  %v769 = vpop.permute.xlu0 %768
  %770 = vrot.lane.b32.xlu0 %v732, 127
  %v771 = vpop.permute.xlu0 %770
  %772 = vrot.lane.b32.xlu0 %v733, 127
  %v773 = vpop.permute.xlu0 %772
  %774 = vrot.lane.b32.xlu0 %v734, 127
  %v775 = vpop.permute.xlu0 %774
  %776 = vrot.lane.b32.xlu0 %v735, 127
  %v777 = vpop.permute.xlu0 %776
  %778 = vrot.lane.b32.xlu0 %v736, 127
  %v779 = vpop.permute.xlu0 %778
  %780 = vrot.lane.b32.xlu0 %v737, 127
  %v781 = vpop.permute.xlu0 %780
  %782 = vrot.lane.b32.xlu0 %v738, 127
  %v783 = vpop.permute.xlu0 %782
  %784 = vrot.lane.b32.xlu0 %v739, 127
  %v785 = vpop.permute.xlu0 %784
  %786 = vrot.lane.b32.xlu0 %v740, 127
  %v787 = vpop.permute.xlu0 %786
  %788 = vrot.lane.b32.xlu0 %v741, 127
  %v789 = vpop.permute.xlu0 %788
  %v806 = vmin.f32 %v726, %v759
  %v807 = vmin.f32 %v727, %v761
  %v808 = vmin.f32 %v728, %v763
  %v809 = vmin.f32 %v729, %v765
  %v810 = vmin.f32 %v730, %v767
  %v811 = vmin.f32 %v731, %v769
  %v812 = vmin.f32 %v732, %v771
  %v813 = vmin.f32 %v733, %v773
  %v814 = vmin.f32 %v734, %v775
  %v815 = vmin.f32 %v735, %v777
  %v816 = vmin.f32 %v736, %v779
  %v817 = vmin.f32 %v737, %v781
  %v818 = vmin.f32 %v738, %v783
  %v819 = vmin.f32 %v739, %v785
  %v820 = vmin.f32 %v740, %v787
  %v821 = vmin.f32 %v741, %v789
  %838 = vrot.lane.b32.xlu0 %v806, 126
  %v839 = vpop.permute.xlu0 %838
  %840 = vrot.lane.b32.xlu0 %v807, 126
  %v841 = vpop.permute.xlu0 %840
  %842 = vrot.lane.b32.xlu0 %v808, 126
  %v843 = vpop.permute.xlu0 %842
  %844 = vrot.lane.b32.xlu0 %v809, 126
  %v845 = vpop.permute.xlu0 %844
  %846 = vrot.lane.b32.xlu0 %v810, 126
  %v847 = vpop.permute.xlu0 %846
  %848 = vrot.lane.b32.xlu0 %v811, 126
  %v849 = vpop.permute.xlu0 %848
  %850 = vrot.lane.b32.xlu0 %v812, 126
  %v851 = vpop.permute.xlu0 %850
  %852 = vrot.lane.b32.xlu0 %v813, 126
  %v853 = vpop.permute.xlu0 %852
  %854 = vrot.lane.b32.xlu0 %v814, 126
  %v855 = vpop.permute.xlu0 %854
  %856 = vrot.lane.b32.xlu0 %v815, 126
  %v857 = vpop.permute.xlu0 %856
  %858 = vrot.lane.b32.xlu0 %v816, 126
  %v859 = vpop.permute.xlu0 %858
  %860 = vrot.lane.b32.xlu0 %v817, 126
  %v861 = vpop.permute.xlu0 %860
  %862 = vrot.lane.b32.xlu0 %v818, 126
  %v863 = vpop.permute.xlu0 %862
  %864 = vrot.lane.b32.xlu0 %v819, 126
  %v865 = vpop.permute.xlu0 %864
  %866 = vrot.lane.b32.xlu0 %v820, 126
  %v867 = vpop.permute.xlu0 %866
  %868 = vrot.lane.b32.xlu0 %v821, 126
  %v869 = vpop.permute.xlu0 %868
  %v886 = vmin.f32 %v806, %v839
  %v887 = vmin.f32 %v807, %v841
  %v888 = vmin.f32 %v808, %v843
  %v889 = vmin.f32 %v809, %v845
  %v890 = vmin.f32 %v810, %v847
  %v891 = vmin.f32 %v811, %v849
  %v892 = vmin.f32 %v812, %v851
  %v893 = vmin.f32 %v813, %v853
  %v894 = vmin.f32 %v814, %v855
  %v895 = vmin.f32 %v815, %v857
  %v896 = vmin.f32 %v816, %v859
  %v897 = vmin.f32 %v817, %v861
  %v898 = vmin.f32 %v818, %v863
  %v899 = vmin.f32 %v819, %v865
  %v900 = vmin.f32 %v820, %v867
  %v901 = vmin.f32 %v821, %v869
  %918 = vrot.lane.b32.xlu0 %v886, 124
  %v919 = vpop.permute.xlu0 %918
  %920 = vrot.lane.b32.xlu0 %v887, 124
  %v921 = vpop.permute.xlu0 %920
  %922 = vrot.lane.b32.xlu0 %v888, 124
  %v923 = vpop.permute.xlu0 %922
  %924 = vrot.lane.b32.xlu0 %v889, 124
  %v925 = vpop.permute.xlu0 %924
  %926 = vrot.lane.b32.xlu0 %v890, 124
  %v927 = vpop.permute.xlu0 %926
  %928 = vrot.lane.b32.xlu0 %v891, 124
  %v929 = vpop.permute.xlu0 %928
  %930 = vrot.lane.b32.xlu0 %v892, 124
  %v931 = vpop.permute.xlu0 %930
  %932 = vrot.lane.b32.xlu0 %v893, 124
  %v933 = vpop.permute.xlu0 %932
  %934 = vrot.lane.b32.xlu0 %v894, 124
  %v935 = vpop.permute.xlu0 %934
  %936 = vrot.lane.b32.xlu0 %v895, 124
  %v937 = vpop.permute.xlu0 %936
  %938 = vrot.lane.b32.xlu0 %v896, 124
  %v939 = vpop.permute.xlu0 %938
  %940 = vrot.lane.b32.xlu0 %v897, 124
  %v941 = vpop.permute.xlu0 %940
  %942 = vrot.lane.b32.xlu0 %v898, 124
  %v943 = vpop.permute.xlu0 %942
  %944 = vrot.lane.b32.xlu0 %v899, 124
  %v945 = vpop.permute.xlu0 %944
  %946 = vrot.lane.b32.xlu0 %v900, 124
  %v947 = vpop.permute.xlu0 %946
  %948 = vrot.lane.b32.xlu0 %v901, 124
  %v949 = vpop.permute.xlu0 %948
  %v966 = vmin.f32 %v886, %v919
  %v967 = vmin.f32 %v887, %v921
  %v968 = vmin.f32 %v888, %v923
  %v969 = vmin.f32 %v889, %v925
  %v970 = vmin.f32 %v890, %v927
  %v971 = vmin.f32 %v891, %v929
  %v972 = vmin.f32 %v892, %v931
  %v973 = vmin.f32 %v893, %v933
  %v974 = vmin.f32 %v894, %v935
  %v975 = vmin.f32 %v895, %v937
  %v976 = vmin.f32 %v896, %v939
  %v977 = vmin.f32 %v897, %v941
  %v978 = vmin.f32 %v898, %v943
  %v979 = vmin.f32 %v899, %v945
  %v980 = vmin.f32 %v900, %v947
  %v981 = vmin.f32 %v901, %v949
  %998 = vrot.lane.b32.xlu0 %v966, 126
  %v999 = vpop.permute.xlu0 %998
  %1000 = vrot.lane.b32.xlu0 %v967, 126
  %v1001 = vpop.permute.xlu0 %1000
  %1002 = vrot.lane.b32.xlu0 %v968, 126
  %v1003 = vpop.permute.xlu0 %1002
  %1004 = vrot.lane.b32.xlu0 %v969, 126
  %v1005 = vpop.permute.xlu0 %1004
  %1006 = vrot.lane.b32.xlu0 %v970, 126
  %v1007 = vpop.permute.xlu0 %1006
  %1008 = vrot.lane.b32.xlu0 %v971, 126
  %v1009 = vpop.permute.xlu0 %1008
  %1010 = vrot.lane.b32.xlu0 %v972, 126
  %v1011 = vpop.permute.xlu0 %1010
  %1012 = vrot.lane.b32.xlu0 %v973, 126
  %v1013 = vpop.permute.xlu0 %1012
  %1014 = vrot.lane.b32.xlu0 %v974, 126
  %v1015 = vpop.permute.xlu0 %1014
  %1016 = vrot.lane.b32.xlu0 %v975, 126
  %v1017 = vpop.permute.xlu0 %1016
  %1018 = vrot.lane.b32.xlu0 %v976, 126
  %v1019 = vpop.permute.xlu0 %1018
  %1020 = vrot.lane.b32.xlu0 %v977, 126
  %v1021 = vpop.permute.xlu0 %1020
  %1022 = vrot.lane.b32.xlu0 %v978, 126
  %v1023 = vpop.permute.xlu0 %1022
  %1024 = vrot.lane.b32.xlu0 %v979, 126
  %v1025 = vpop.permute.xlu0 %1024
  %1026 = vrot.lane.b32.xlu0 %v980, 126
  %v1027 = vpop.permute.xlu0 %1026
  %1028 = vrot.lane.b32.xlu0 %v981, 126
  %v1029 = vpop.permute.xlu0 %1028
  %v1046 = vmin.f32 %v966, %v999
  %v1047 = vmin.f32 %v967, %v1001
  %v1048 = vmin.f32 %v968, %v1003
  %v1049 = vmin.f32 %v969, %v1005
  %v1050 = vmin.f32 %v970, %v1007
  %v1051 = vmin.f32 %v971, %v1009
  %v1052 = vmin.f32 %v972, %v1011
  %v1053 = vmin.f32 %v973, %v1013
  %v1054 = vmin.f32 %v974, %v1015
  %v1055 = vmin.f32 %v975, %v1017
  %v1056 = vmin.f32 %v976, %v1019
  %v1057 = vmin.f32 %v977, %v1021
  %v1058 = vmin.f32 %v978, %v1023
  %v1059 = vmin.f32 %v979, %v1025
  %v1060 = vmin.f32 %v980, %v1027
  %v1061 = vmin.f32 %v981, %v1029
  %v1062 = vtrunc.f32 %v1046
  %v1063 = vtrunc.f32 %v1047
  %v1064 = vtrunc.f32 %v1048
  %v1065 = vtrunc.f32 %v1049
  %v1066 = vtrunc.f32 %v1050
  %v1067 = vtrunc.f32 %v1051
  %v1068 = vtrunc.f32 %v1052
  %v1069 = vtrunc.f32 %v1053
  %v1070 = vtrunc.f32 %v1054
  %v1071 = vtrunc.f32 %v1055
  %v1072 = vtrunc.f32 %v1056
  %v1073 = vtrunc.f32 %v1057
  %v1074 = vtrunc.f32 %v1058
  %v1075 = vtrunc.f32 %v1059
  %v1076 = vtrunc.f32 %v1060
  %v1077 = vtrunc.f32 %v1061
  %v1078 = vpack.c.f32.eXmY %v1062, %v1063, 312
  %v1082 = vpack.c.b8 %v1078, %v1078
  %v1084 = vpack.c.f32.eXmY %v1064, %v1065, 312
  %v1088 = vpack.c.b8 %v1084, %v1084
  %v1090 = vpack.c.f32.eXmY %v1066, %v1067, 312
  %v1094 = vpack.c.b8 %v1090, %v1090
  %v1096 = vpack.c.f32.eXmY %v1068, %v1069, 312
  %v1100 = vpack.c.b8 %v1096, %v1096
  %v1102 = vpack.c.f32.eXmY %v1070, %v1071, 312
  %v1106 = vpack.c.b8 %v1102, %v1102
  %v1108 = vpack.c.f32.eXmY %v1072, %v1073, 312
  %v1112 = vpack.c.b8 %v1108, %v1108
  %v1114 = vpack.c.f32.eXmY %v1074, %v1075, 312
  %v1118 = vpack.c.b8 %v1114, %v1114
  %v1120 = vpack.c.f32.eXmY %v1076, %v1077, 312
  %v1124 = vpack.c.b8 %v1120, %v1120
  %v1126 = vunpack.c.0.s8 %v1082
  %v1127 = vunpack.c.1.s8 %v1082
  %v1128 = vunpack.c.0.s8 %v1088
  %v1129 = vunpack.c.1.s8 %v1088
  %v1130 = vunpack.c.0.s8 %v1094
  %v1131 = vunpack.c.1.s8 %v1094
  %v1132 = vunpack.c.0.s8 %v1100
  %v1133 = vunpack.c.1.s8 %v1100
  %v1134 = vunpack.c.0.s8 %v1106
  %v1135 = vunpack.c.1.s8 %v1106
  %v1136 = vunpack.c.0.s8 %v1112
  %v1137 = vunpack.c.1.s8 %v1112
  %v1138 = vunpack.c.0.s8 %v1118
  %v1139 = vunpack.c.1.s8 %v1118
  %v1140 = vunpack.c.0.s8 %v1124
  %v1141 = vunpack.c.1.s8 %v1124
  %v1142 = vpack.c.b16 %v1126, %v1126
  %v1143 = vpack.c.b8 %v1142, %v1142
  %v1144 = vpack.c.b16 %v1127, %v1127
  %v1145 = vpack.c.b8 %v1144, %v1144
  %v1146 = vpack.c.b16 %v1128, %v1128
  %v1147 = vpack.c.b8 %v1146, %v1146
  %v1148 = vpack.c.b16 %v1129, %v1129
  %v1149 = vpack.c.b8 %v1148, %v1148
  %v1150 = vpack.c.b16 %v1130, %v1130
  %v1151 = vpack.c.b8 %v1150, %v1150
  %v1152 = vpack.c.b16 %v1131, %v1131
  %v1153 = vpack.c.b8 %v1152, %v1152
  %v1154 = vpack.c.b16 %v1132, %v1132
  %v1155 = vpack.c.b8 %v1154, %v1154
  %v1156 = vpack.c.b16 %v1133, %v1133
  %v1157 = vpack.c.b8 %v1156, %v1156
  %v1158 = vpack.c.b16 %v1134, %v1134
  %v1159 = vpack.c.b8 %v1158, %v1158
  %v1160 = vpack.c.b16 %v1135, %v1135
  %v1161 = vpack.c.b8 %v1160, %v1160
  %v1162 = vpack.c.b16 %v1136, %v1136
  %v1163 = vpack.c.b8 %v1162, %v1162
  %v1164 = vpack.c.b16 %v1137, %v1137
  %v1165 = vpack.c.b8 %v1164, %v1164
  %v1166 = vpack.c.b16 %v1138, %v1138
  %v1167 = vpack.c.b8 %v1166, %v1166
  %v1168 = vpack.c.b16 %v1139, %v1139
  %v1169 = vpack.c.b8 %v1168, %v1168
  %v1170 = vpack.c.b16 %v1140, %v1140
  %v1171 = vpack.c.b8 %v1170, %v1170
  %v1172 = vpack.c.b16 %v1141, %v1141
  %v1173 = vpack.c.b8 %v1172, %v1172
  %vm1174 = vcmask 123904
  %1175 = vst.msk [vmem:[%s2] sm:$0x3] %vm1174, %v1143
  %1176 = vst.msk [vmem:[%s2 + $0x2] sm:$0x3] %vm1174, %v1145
  %1177 = vst.msk [vmem:[%s2 + $0x4] sm:$0x3] %vm1174, %v1147
  %1178 = vst.msk [vmem:[%s2 + $0x6] sm:$0x3] %vm1174, %v1149
  %1179 = vst.msk [vmem:[%s2 + $0x8] sm:$0x3] %vm1174, %v1151
  %1180 = vst.msk [vmem:[%s2 + $0xa] sm:$0x3] %vm1174, %v1153
  %1181 = vst.msk [vmem:[%s2 + $0xc] sm:$0x3] %vm1174, %v1155
  %1182 = vst.msk [vmem:[%s2 + $0xe] sm:$0x3] %vm1174, %v1157
  %1183 = vst.msk [vmem:[%s2 + $0x10] sm:$0x3] %vm1174, %v1159
  %1184 = vst.msk [vmem:[%s2 + $0x12] sm:$0x3] %vm1174, %v1161
  %1185 = vst.msk [vmem:[%s2 + $0x14] sm:$0x3] %vm1174, %v1163
  %1186 = vst.msk [vmem:[%s2 + $0x16] sm:$0x3] %vm1174, %v1165
  %1187 = vst.msk [vmem:[%s2 + $0x18] sm:$0x3] %vm1174, %v1167
  %1188 = vst.msk [vmem:[%s2 + $0x1a] sm:$0x3] %vm1174, %v1169
  %1189 = vst.msk [vmem:[%s2 + $0x1c] sm:$0x3] %vm1174, %v1171
  %1190 = vst.msk [vmem:[%s2 + $0x1e] sm:$0x3] %vm1174, %v1173
  %vm1191 = vcmask 130048
  %v1192 = vsel %vm1191, %v1046, 0.0
  %v1193 = vsel %vm1191, %v1048, 0.0
  %v1194 = vadd.f32 %v1192, %v1193
  %v1195 = vsel %vm1191, %v1050, 0.0
  %v1196 = vadd.f32 %v1194, %v1195
  %v1197 = vsel %vm1191, %v1052, 0.0
  %v1198 = vadd.f32 %v1196, %v1197
  %v1199 = vsel %vm1191, %v1054, 0.0
  %v1200 = vadd.f32 %v1198, %v1199
  %v1201 = vsel %vm1191, %v1056, 0.0
  %v1202 = vadd.f32 %v1200, %v1201
  %v1203 = vsel %vm1191, %v1058, 0.0
  %v1204 = vadd.f32 %v1202, %v1203
  %v1205 = vsel %vm1191, %v1060, 0.0
  %v1206 = vadd.f32 %v1204, %v1205
  %v1207 = vsel %vm1191, %v1047, 0.0
  %v1208 = vsel %vm1191, %v1049, 0.0
  %v1209 = vadd.f32 %v1207, %v1208
  %v1210 = vsel %vm1191, %v1051, 0.0
  %v1211 = vadd.f32 %v1209, %v1210
  %v1212 = vsel %vm1191, %v1053, 0.0
  %v1213 = vadd.f32 %v1211, %v1212
  %v1214 = vsel %vm1191, %v1055, 0.0
  %v1215 = vadd.f32 %v1213, %v1214
  %v1216 = vsel %vm1191, %v1057, 0.0
  %v1217 = vadd.f32 %v1215, %v1216
  %v1218 = vsel %vm1191, %v1059, 0.0
  %v1219 = vadd.f32 %v1217, %v1218
  %v1220 = vsel %vm1191, %v1061, 0.0
  %v1221 = vadd.f32 %v1219, %v1220
  %v1222 = vsel %vm1191, %v1206, 0.0
  %v1223 = vsel %vm1191, %v1221, 0.0
  %v1224 = vadd.f32 %v1222, %v1223
  %1225 = vadd.xlane.f32.xlu0 %v1224
  %v1226 = vpop.xlane.xlu0 %1225
  %v1227 = vrot.slane %v1226, 4
  %v1228 = vadd.f32 %v1226, %v1227
  %v1229 = vrot.slane %v1228, 2
  %v1230 = vadd.f32 %v1228, %v1229
  %v1231 = vrot.slane %v1230, 1
  %v1232 = vadd.f32 %v1230, %v1231
  %s1233 = vtos %v1232
  %v1234 = vstv %s1233
  %1235 = vst [vmem:[%s3] sm:$0x1] %v1234
  %v1236 = vsel %vm1191, %v31, 0.0
  %v1237 = vsel %vm1191, %v33, 0.0
  %v1238 = vadd.f32 %v1236, %v1237
  %v1239 = vsel %vm1191, %v35, 0.0
  %v1240 = vadd.f32 %v1238, %v1239
  %v1241 = vsel %vm1191, %v37, 0.0
  %v1242 = vadd.f32 %v1240, %v1241
  %v1243 = vsel %vm1191, %v39, 0.0
  %v1244 = vadd.f32 %v1242, %v1243
  %v1245 = vsel %vm1191, %v41, 0.0
  %v1246 = vadd.f32 %v1244, %v1245
  %v1247 = vsel %vm1191, %v43, 0.0
  %v1248 = vadd.f32 %v1246, %v1247
  %v1249 = vsel %vm1191, %v45, 0.0
  %v1250 = vadd.f32 %v1248, %v1249
  %v1251 = vsel %vm1191, %v32, 0.0
  %v1252 = vsel %vm1191, %v34, 0.0
  %v1253 = vadd.f32 %v1251, %v1252
  %v1254 = vsel %vm1191, %v36, 0.0
  %v1255 = vadd.f32 %v1253, %v1254
  %v1256 = vsel %vm1191, %v38, 0.0
  %v1257 = vadd.f32 %v1255, %v1256
  %v1258 = vsel %vm1191, %v40, 0.0
  %v1259 = vadd.f32 %v1257, %v1258
  %v1260 = vsel %vm1191, %v42, 0.0
  %v1261 = vadd.f32 %v1259, %v1260
  %v1262 = vsel %vm1191, %v44, 0.0
  %v1263 = vadd.f32 %v1261, %v1262
  %v1264 = vsel %vm1191, %v46, 0.0
  %v1265 = vadd.f32 %v1263, %v1264
  %v1266 = vsel %vm1191, %v1250, 0.0
  %v1267 = vsel %vm1191, %v1265, 0.0
  %v1268 = vadd.f32 %v1266, %v1267
  %1269 = vadd.xlane.f32.xlu0 %v1268
  %v1270 = vpop.xlane.xlu0 %1269
  %v1271 = vrot.slane %v1270, 4
  %v1272 = vadd.f32 %v1270, %v1271
  %v1273 = vrot.slane %v1272, 2
  %v1274 = vadd.f32 %v1272, %v1273
  %v1275 = vrot.slane %v1274, 1
  %v1276 = vadd.f32 %v1274, %v1275
  %s1277 = vtos %v1276
  %v1278 = vstv %s1277
  %1279 = vst [vmem:[%s4] sm:$0x1] %v1278
  %v1280 = vmul.f32 %v31, %v31
  %v1281 = vmul.f32 %v32, %v32
  %v1282 = vmul.f32 %v33, %v33
  %v1283 = vmul.f32 %v34, %v34
  %v1284 = vmul.f32 %v35, %v35
  %v1285 = vmul.f32 %v36, %v36
  %v1286 = vmul.f32 %v37, %v37
  %v1287 = vmul.f32 %v38, %v38
  %v1288 = vmul.f32 %v39, %v39
  %v1289 = vmul.f32 %v40, %v40
  %v1290 = vmul.f32 %v41, %v41
  %v1291 = vmul.f32 %v42, %v42
  %v1292 = vmul.f32 %v43, %v43
  %v1293 = vmul.f32 %v44, %v44
  %v1294 = vmul.f32 %v45, %v45
  %v1295 = vmul.f32 %v46, %v46
  %v1296 = vsel %vm1191, %v1280, 0.0
  %v1297 = vsel %vm1191, %v1282, 0.0
  %v1298 = vadd.f32 %v1296, %v1297
  %v1299 = vsel %vm1191, %v1284, 0.0
  %v1300 = vadd.f32 %v1298, %v1299
  %v1301 = vsel %vm1191, %v1286, 0.0
  %v1302 = vadd.f32 %v1300, %v1301
  %v1303 = vsel %vm1191, %v1288, 0.0
  %v1304 = vadd.f32 %v1302, %v1303
  %v1305 = vsel %vm1191, %v1290, 0.0
  %v1306 = vadd.f32 %v1304, %v1305
  %v1307 = vsel %vm1191, %v1292, 0.0
  %v1308 = vadd.f32 %v1306, %v1307
  %v1309 = vsel %vm1191, %v1294, 0.0
  %v1310 = vadd.f32 %v1308, %v1309
  %v1311 = vsel %vm1191, %v1281, 0.0
  %v1312 = vsel %vm1191, %v1283, 0.0
  %v1313 = vadd.f32 %v1311, %v1312
  %v1314 = vsel %vm1191, %v1285, 0.0
  %v1315 = vadd.f32 %v1313, %v1314
  %v1316 = vsel %vm1191, %v1287, 0.0
  %v1317 = vadd.f32 %v1315, %v1316
  %v1318 = vsel %vm1191, %v1289, 0.0
  %v1319 = vadd.f32 %v1317, %v1318
  %v1320 = vsel %vm1191, %v1291, 0.0
  %v1321 = vadd.f32 %v1319, %v1320
  %v1322 = vsel %vm1191, %v1293, 0.0
  %v1323 = vadd.f32 %v1321, %v1322
  %v1324 = vsel %vm1191, %v1295, 0.0
  %v1325 = vadd.f32 %v1323, %v1324
  %v1326 = vsel %vm1191, %v1310, 0.0
  %v1327 = vsel %vm1191, %v1325, 0.0
  %v1328 = vadd.f32 %v1326, %v1327
  %1329 = vadd.xlane.f32.xlu0 %v1328
  %v1330 = vpop.xlane.xlu0 %1329
  %v1331 = vrot.slane %v1330, 4
  %v1332 = vadd.f32 %v1330, %v1331
  %v1333 = vrot.slane %v1332, 2
  %v1334 = vadd.f32 %v1332, %v1333
  %v1335 = vrot.slane %v1334, 1
  %v1336 = vadd.f32 %v1334, %v1335
  %s1337 = vtos %v1336
  %v1338 = vstv %s1337
  %1339 = vst [vmem:[%s5] sm:$0x1] %v1338
  // Predicated region
  $region10: #{disout_pallas.2} parent=0 // pred_check
    _
  $region11: #{disout_pallas.2} parent=0 // pred_check_branch
    %1341 = sbr.rel (0) target = $region13
  $region12: #{disout_pallas.2} parent=0 // pred_region
    _
  $region13: #{disout_pallas.2} parent=0 // pred_fallthru
    _
  // Predicated region
  $region14: #{disout_pallas.2} parent=0 // pred_check
    _
  $region15: #{disout_pallas.2} parent=0 // pred_check_branch
    %1343 = sbr.rel (0) target = $region17
  $region16: #{disout_pallas.2} parent=0 // pred_region
    _
  $region17: #{disout_pallas.2} parent=0 // pred_fallthru
    _
  // Predicated region
  $region18: #{disout_pallas.2} parent=0 // pred_check
    _
  $region19: #{disout_pallas.2} parent=0 // pred_check_branch
    %1345 = sbr.rel (0) target = $region21
  $region20: #{disout_pallas.2} parent=0 // pred_region
    _
  $region21: #{disout_pallas.2} parent=0 // pred_fallthru
    _
  // Predicated region
  $region22: #{disout_pallas.2} parent=0 // pred_check
    _
  $region23: #{disout_pallas.2} parent=0 // pred_check_branch
    %1347 = sbr.rel (0) target = $region25
  $region24: #{disout_pallas.2} parent=0 // pred_region
    _
  $region25: #{disout_pallas.2} parent=0 // pred_fallthru
    _
  // Predicated region
  $region26: #{disout_pallas.2} parent=0 // pred_check
    _
  $region27: #{disout_pallas.2} parent=0 // pred_check_branch
    %1349 = sbr.rel (0) target = $region29
  $region28: #{disout_pallas.2} parent=0 // pred_region
    _
  $region29: #{disout_pallas.2} parent=0 // pred_fallthru
    _
  // Predicated region
  $region30: #{disout_pallas.2} parent=0 // pred_check
    _
  $region31: #{disout_pallas.2} parent=0 // pred_check_branch
    %1351 = sbr.rel (0) target = $region33
  $region32: #{disout_pallas.2} parent=0 // pred_region
    _
  $region33: #{disout_pallas.2} parent=0 // pred_fallthru
    _
  // Predicated region
  $region34: #{disout_pallas.2} parent=0 // pred_check
    _
  $region35: #{disout_pallas.2} parent=0 // pred_check_branch
    %1353 = sbr.rel (0) target = $region37
  $region36: #{disout_pallas.2} parent=0 // pred_region
    _
  $region37: #{disout_pallas.2} parent=0 // pred_fallthru
    _
  // Predicated region
  $region38: #{disout_pallas.2} parent=0 // pred_check
    _
  $region39: #{disout_pallas.2} parent=0 // pred_check_branch
    %1355 = sbr.rel (0) target = $region41
  $region40: #{disout_pallas.2} parent=0 // pred_region
    _
  $region41: #{disout_pallas.2} parent=0 // pred_fallthru
    _

</llo_original>
